<compile_context>
chip_gen: v5e
topology: v5e:2x2
jax: 0.10.0
libtpu: 0.0.40
codegen_flags: <defaults>
</compile_context>

<pallas_src>
import jax
import jax.numpy as jnp
from jax.experimental import pallas as pl
from jax.experimental.pallas import tpu as pltpu


def _vggloss_kernel(xp_ref, yp_ref, w_ref, b_ref, out_ref):
    """One grid step = one chunk of R flattened output pixels.

    xp_ref, yp_ref : (1, R, 27) bf16   im2col patches for x / y chunk
    w_ref          : (27, Cout) bf16   conv1_1 weight, row order (dy, dx, c)
    b_ref          : (1, Cout)  f32    conv1_1 bias
    out_ref        : (1, 1, Cout) f32  per-chunk partial sums (lane-dense)
    """
    w = w_ref[...]                                   # (27, Cout) bf16
    b = b_ref[...]                                   # (1, Cout)  f32

    # conv1_1 + bias + ReLU, fused for both inputs; single MXU pass each.
    fx = jnp.maximum(
        jnp.dot(xp_ref[0], w, preferred_element_type=jnp.float32) + b, 0.0)
    fy = jnp.maximum(
        jnp.dot(yp_ref[0], w, preferred_element_type=jnp.float32) + b, 0.0)

    d = jnp.abs(fx - fy)                             # (R, Cout) f32
    # Row (sublane) reduction -> lane-dense (1, Cout) partial for this chunk.
    out_ref[0] = jnp.sum(d, axis=0, keepdims=True)


def vgg_loss(x_nchw, y_nchw, w_oihw, bias, *, max_rows=2048):
    """x, y: (B, 3, H, W) float32 (PyTorch NCHW). Returns the scalar VGGLoss."""
    B, Cin, H, W = x_nchw.shape
    Cout = w_oihw.shape[0]
    K = 9 * Cin                                      # im2col contraction = 27

    rows_total = B * H * W
    # Chunk size: multiple of 8, capped at max_rows (keeps double-buffered
    # per-step VMEM around ~2 MiB even for large images).
    R = min(max_rows, ((rows_total + 7) // 8) * 8)
    R = ((R + 7) // 8) * 8
    T = pl.cdiv(rows_total, R)
    rows_padded = T * R

    def im2col(img_nchw):
        # Layout plumbing only (no compute): NCHW -> NHWC -> pad=1 ->
        # (T, R, 27) bf16 patch slabs, column order (dy, dx, c).
        img = jnp.transpose(img_nchw, (0, 2, 3, 1)).astype(jnp.bfloat16)
        pad = jnp.pad(img, ((0, 0), (1, 1), (1, 1), (0, 0)))
        cols = [pad[:, dy:dy + H, dx:dx + W, :]      # (B, H, W, Cin)
                for dy in range(3) for dx in range(3)]
        pat = jnp.concatenate(cols, axis=-1).reshape(rows_total, K)
        if rows_padded != rows_total:
            # Zero patches -> relu(bias) for both x and y -> zero L1 contribution.
            pat = jnp.pad(pat, ((0, rows_padded - rows_total), (0, 0)))
        return pat.reshape(T, R, K)

    xp = im2col(x_nchw)
    yp = im2col(y_nchw)
    # PyTorch OIHW -> (dy, dx, c, o) -> (27, Cout); row order matches im2col.
    w27 = jnp.transpose(w_oihw, (2, 3, 1, 0)).reshape(K, Cout).astype(jnp.bfloat16)
    b2 = bias.reshape(1, Cout).astype(jnp.float32)

    part = pl.pallas_call(
        _vggloss_kernel,
        out_shape=jax.ShapeDtypeStruct((T, 1, Cout), jnp.float32),
        grid=(T,),
        in_specs=[
            pl.BlockSpec((1, R, K), lambda t: (t, 0, 0)),
            pl.BlockSpec((1, R, K), lambda t: (t, 0, 0)),
            pl.BlockSpec((K, Cout), lambda t: (0, 0)),
            pl.BlockSpec((1, Cout), lambda t: (0, 0)),
        ],
        out_specs=pl.BlockSpec((1, 1, Cout), lambda t: (t, 0, 0)),
        compiler_params=pltpu.CompilerParams(
            dimension_semantics=("parallel",)),
    )(xp, yp, w27, b2)

    numel = B * H * W * Cout                         # true (unpadded) element count
    return (1.0 / 32.0) * jnp.sum(part) / numel


def _ref_loss(x, y, w_oihw, bias):
    """Pure-JAX f32 reference of the same math (conv1_1 + ReLU + weighted L1)."""
    def feat(inp):
        o = jax.lax.conv_general_dilated(
            inp, w_oihw, window_strides=(1, 1), padding="SAME",
            dimension_numbers=("NCHW", "OIHW", "NCHW"),
            precision=jax.lax.Precision.HIGHEST)
        return jnp.maximum(o + bias.reshape(1, -1, 1, 1), 0.0)
    return (1.0 / 32.0) * jnp.mean(jnp.abs(feat(x) - feat(y)))


if __name__ == "__main__":
    key = jax.random.PRNGKey(0)
    kx, ky, kw, kb = jax.random.split(key, 4)

    B, Cin, H, W = 2, 3, 16, 16      # VGG conv1_1 requires 3 input channels
    Cout = 64                        # vgg19.features[0] output channels

    x = jax.random.normal(kx, (B, Cin, H, W), jnp.float32)
    y = jax.random.normal(ky, (B, Cin, H, W), jnp.float32)
    # Deterministic synthetic conv1_1 parameters (PyTorch shapes: OIHW, (Cout,))
    w = 0.1 * jax.random.normal(kw, (Cout, Cin, 3, 3), jnp.float32)
    bias = 0.1 * jax.random.normal(kb, (Cout,), jnp.float32)

    loss = jax.jit(vgg_loss)(x, y, w, bias)
    jax.block_until_ready(loss)

    ref = _ref_loss(x, y, w, bias)
    # bf16 MXU operands with f32 accumulation: relaxed tolerance vs f32 ref.
    assert jnp.allclose(loss, ref, rtol=2e-2, atol=1e-6), (float(loss), float(ref))

    print("KERNEL_OK")
</pallas_src>

<mosaic_0001>
module attributes {stable_mosaic.version = 11 : i64} {
  func.func @_vggloss_kernel(%arg0: i32, %arg1: memref<1x512x27xbf16, #tpu.memory_space<vmem>>, %arg2: memref<1x512x27xbf16, #tpu.memory_space<vmem>>, %arg3: memref<27x64xbf16, #tpu.memory_space<vmem>>, %arg4: memref<1x64xf32, #tpu.memory_space<vmem>>, %arg5: memref<1x1x64xf32, #tpu.memory_space<vmem>>) attributes {dimension_semantics = [#tpu.dimension_semantics<parallel>], iteration_bounds = array<i64: 1>, scalar_prefetch = 0 : i64, scratch_operands = 0 : i64, tpu.core_type = #tpu.core_type<tc>, window_params = [{transform_indices = @transform_0, window_bounds = array<i64: 1, 512, 27>}, {transform_indices = @transform_1, window_bounds = array<i64: 1, 512, 27>}, {pipeline_mode = #tpu.pipeline_mode<synchronous>, transform_indices = @transform_2, window_bounds = array<i64: 27, 64>}, {pipeline_mode = #tpu.pipeline_mode<synchronous>, transform_indices = @transform_3, window_bounds = array<i64: 1, 64>}, {transform_indices = @transform_4, window_bounds = array<i64: 1, 1, 64>}]} {
    %c0 = arith.constant 0 : index
    %c0_0 = arith.constant 0 : index
    %0 = vector.load %arg3[%c0, %c0_0] : memref<27x64xbf16, #tpu.memory_space<vmem>>, vector<27x64xbf16>
    %c0_1 = arith.constant 0 : index
    %c0_2 = arith.constant 0 : index
    %1 = vector.load %arg4[%c0_1, %c0_2] : memref<1x64xf32, #tpu.memory_space<vmem>>, vector<1x64xf32>
    %c0_3 = arith.constant 0 : index
    %c0_4 = arith.constant 0 : index
    %c0_5 = arith.constant 0 : index
    %2 = vector.load %arg1[%c0_3, %c0_4, %c0_5] : memref<1x512x27xbf16, #tpu.memory_space<vmem>>, vector<1x512x27xbf16>
    %3 = vector.shape_cast %2 : vector<1x512x27xbf16> to vector<512x27xbf16>
    %cst = arith.constant dense<0.000000e+00> : vector<512x64xf32>
    %4 = tpu.matmul %3, %0, %cst {dimension_numbers = #tpu.dot_dimension_numbers<[1], [0], [0], [1], [0, 0, 1, 1], [], []>} : vector<512x27xbf16>, vector<27x64xbf16>, vector<512x64xf32> -> vector<512x64xf32>
    %5 = vector.broadcast %1 : vector<1x64xf32> to vector<512x64xf32>
    %6 = arith.addf %4, %5 : vector<512x64xf32>
    %cst_6 = arith.constant 0.000000e+00 : f32
    %7 = vector.broadcast %cst_6 : f32 to vector<512x64xf32>
    %8 = arith.maximumf %6, %7 : vector<512x64xf32>
    %c0_7 = arith.constant 0 : index
    %c0_8 = arith.constant 0 : index
    %c0_9 = arith.constant 0 : index
    %9 = vector.load %arg2[%c0_7, %c0_8, %c0_9] : memref<1x512x27xbf16, #tpu.memory_space<vmem>>, vector<1x512x27xbf16>
    %10 = vector.shape_cast %9 : vector<1x512x27xbf16> to vector<512x27xbf16>
    %cst_10 = arith.constant dense<0.000000e+00> : vector<512x64xf32>
    %11 = tpu.matmul %10, %0, %cst_10 {dimension_numbers = #tpu.dot_dimension_numbers<[1], [0], [0], [1], [0, 0, 1, 1], [], []>} : vector<512x27xbf16>, vector<27x64xbf16>, vector<512x64xf32> -> vector<512x64xf32>
    %12 = vector.broadcast %1 : vector<1x64xf32> to vector<512x64xf32>
    %13 = arith.addf %11, %12 : vector<512x64xf32>
    %cst_11 = arith.constant 0.000000e+00 : f32
    %14 = vector.broadcast %cst_11 : f32 to vector<512x64xf32>
    %15 = arith.maximumf %13, %14 : vector<512x64xf32>
    %16 = arith.subf %8, %15 : vector<512x64xf32>
    %17 = math.absf %16 : vector<512x64xf32>
    %cst_12 = arith.constant dense<0.000000e+00> : vector<64xf32>
    %18 = vector.multi_reduction <add>, %17, %cst_12 [0] : vector<512x64xf32> to vector<64xf32>
    %19 = vector.shape_cast %18 : vector<64xf32> to vector<1x64xf32>
    %c0_13 = arith.constant 0 : index
    %c0_14 = arith.constant 0 : index
    %c0_15 = arith.constant 0 : index
    %20 = vector.load %arg5[%c0_13, %c0_14, %c0_15] : memref<1x1x64xf32, #tpu.memory_space<vmem>>, vector<1x1x64xf32>
    %21 = vector.shape_cast %20 : vector<1x1x64xf32> to vector<1x64xf32>
    %22 = vector.shape_cast %19 : vector<1x64xf32> to vector<1x1x64xf32>
    tpu.vector_store %arg5[%c0_13, %c0_14, %c0_15], %22 {strides = array<i32>} : memref<1x1x64xf32, #tpu.memory_space<vmem>>, vector<1x1x64xf32>,
    return
  }
  func.func @transform_0(%arg0: i32) -> (i32, i32, i32) {
    %c0_i32 = arith.constant 0 : i32
    %c0_i32_0 = arith.constant 0 : i32
    %c0_i32_1 = arith.constant 0 : i32
    return %arg0, %c0_i32, %c0_i32_0 : i32, i32, i32
  }
  func.func @transform_1(%arg0: i32) -> (i32, i32, i32) {
    %c0_i32 = arith.constant 0 : i32
    %c0_i32_0 = arith.constant 0 : i32
    %c0_i32_1 = arith.constant 0 : i32
    return %arg0, %c0_i32, %c0_i32_0 : i32, i32, i32
  }
  func.func @transform_2(%arg0: i32) -> (i32, i32) {
    %c0_i32 = arith.constant 0 : i32
    %c0_i32_0 = arith.constant 0 : i32
    %c0_i32_1 = arith.constant 0 : i32
    return %c0_i32, %c0_i32_0 : i32, i32
  }
  func.func @transform_3(%arg0: i32) -> (i32, i32) {
    %c0_i32 = arith.constant 0 : i32
    %c0_i32_0 = arith.constant 0 : i32
    %c0_i32_1 = arith.constant 0 : i32
    return %c0_i32, %c0_i32_0 : i32, i32
  }
  func.func @transform_4(%arg0: i32) -> (i32, i32, i32) {
    %c0_i32 = arith.constant 0 : i32
    %c0_i32_0 = arith.constant 0 : i32
    %c0_i32_1 = arith.constant 0 : i32
    return %arg0, %c0_i32, %c0_i32_0 : i32, i32, i32
  }
}

</mosaic_0001>

<llo_original>
// kernel: vgg_loss.1
$region0: #{vgg_loss.1}
  #allocation0 [shape = 'u32[]', space=smem, size = 0x4, offset = 0x4, fixed_abs, tag = 'smem constant byte address 0x4 - core index']
  #allocation1 [shape = 'u32[72,128]{1,0:T(1,128)}', space=vmem, size = 0x9000, scoped, tag = 'internal scratch']
  %s0 = inlined_call_operand.vmem [shape: bf16[1,512,27], index: 0, kind: input, shape index: {}]
  %s1 = inlined_call_operand.vmem [shape: bf16[1,512,27], index: 1, kind: input, shape index: {}]
  %s2 = inlined_call_operand.vmem [shape: bf16[27,64], index: 2, kind: input, shape index: {}]
  %s3 = inlined_call_operand.vmem [shape: f32[1,64], index: 3, kind: input, shape index: {}]
  %s4 = inlined_call_operand.vmem [shape: f32[1,1,64], index: 4, kind: output, shape index: {}]
  %s5 = sld [smem:[#allocation0]]
  $region26: #{vgg_loss.1} parent=0
    _
  %s7 = ssub.s32 1, %s5
  %s8 = scalar_select 0, %s7, %s5
  // Predicated region
  $region2: #{vgg_loss.1} parent=0 // pred_check
    _
  $region3: #{vgg_loss.1} parent=0 // pred_check_branch
    %10 = sbr.rel (0) target = $region5
  $region4: #{vgg_loss.1} parent=0 // pred_region
    _
  $region5: #{vgg_loss.1} parent=0 // pred_fallthru
    _
  // Predicated region
  $region6: #{vgg_loss.1} parent=0 // pred_check
    _
  $region7: #{vgg_loss.1} parent=0 // pred_check_branch
    %12 = sbr.rel (0) target = $region9
  $region8: #{vgg_loss.1} parent=0 // pred_region
    _
  $region9: #{vgg_loss.1} parent=0 // pred_fallthru
    _
  // Predicated region
  $region10: #{vgg_loss.1} parent=0 // pred_check
    _
  $region11: #{vgg_loss.1} parent=0 // pred_check_branch
    %14 = sbr.rel (0) target = $region13
  $region12: #{vgg_loss.1} parent=0 // pred_region
    _
  $region13: #{vgg_loss.1} parent=0 // pred_fallthru
    _
  // Predicated region
  $region14: #{vgg_loss.1} parent=0 // pred_check
    _
  $region15: #{vgg_loss.1} parent=0 // pred_check_branch
    %16 = sbr.rel (0) target = $region17
  $region16: #{vgg_loss.1} parent=0 // pred_region
    _
  $region17: #{vgg_loss.1} parent=0 // pred_fallthru
    _
  %v18 = vld [vmem:[%s2] sm:$0xf]
  %v19 = vld [vmem:[%s2 + $0x4] sm:$0xf]
  %v20 = vld [vmem:[%s2 + $0x8] sm:$0xf]
  %v21 = vld [vmem:[%s2 + $0xc] sm:$0x3]
  %v22 = vld [vmem:[%s3] sm:$0x1]
  %v23 = vld [vmem:[%s0] sm:$0xf]
  %v24 = vld [vmem:[%s0 + $0x4] sm:$0xf]
  %v25 = vld [vmem:[%s0 + $0x8] sm:$0xf]
  %v26 = vld [vmem:[%s0 + $0xc] sm:$0xf]
  %v27 = vld [vmem:[%s0 + $0x10] sm:$0xf]
  %v28 = vld [vmem:[%s0 + $0x14] sm:$0xf]
  %v29 = vld [vmem:[%s0 + $0x18] sm:$0xf]
  %v30 = vld [vmem:[%s0 + $0x1c] sm:$0xf]
  %v31 = vld [vmem:[%s0 + $0x20] sm:$0xf]
  %v32 = vld [vmem:[%s0 + $0x24] sm:$0xf]
  %v33 = vld [vmem:[%s0 + $0x28] sm:$0xf]
  %v34 = vld [vmem:[%s0 + $0x2c] sm:$0xf]
  %v35 = vld [vmem:[%s0 + $0x30] sm:$0xf]
  %v36 = vld [vmem:[%s0 + $0x34] sm:$0xf]
  %v37 = vld [vmem:[%s0 + $0x38] sm:$0xf]
  %v38 = vld [vmem:[%s0 + $0x3c] sm:$0xf]
  %v39 = vld [vmem:[%s0 + $0x40] sm:$0xf]
  %v40 = vld [vmem:[%s0 + $0x44] sm:$0xf]
  %v41 = vld [vmem:[%s0 + $0x48] sm:$0xf]
  %v42 = vld [vmem:[%s0 + $0x4c] sm:$0xf]
  %v43 = vld [vmem:[%s0 + $0x50] sm:$0xf]
  %v44 = vld [vmem:[%s0 + $0x54] sm:$0xf]
  %v45 = vld [vmem:[%s0 + $0x58] sm:$0xf]
  %v46 = vld [vmem:[%s0 + $0x5c] sm:$0xf]
  %v47 = vld [vmem:[%s0 + $0x60] sm:$0xf]
  %v48 = vld [vmem:[%s0 + $0x64] sm:$0xf]
  %v49 = vld [vmem:[%s0 + $0x68] sm:$0xf]
  %v50 = vld [vmem:[%s0 + $0x6c] sm:$0xf]
  %v51 = vld [vmem:[%s0 + $0x70] sm:$0xf]
  %v52 = vld [vmem:[%s0 + $0x74] sm:$0xf]
  %v53 = vld [vmem:[%s0 + $0x78] sm:$0xf]
  %v54 = vld [vmem:[%s0 + $0x7c] sm:$0xf]
  %v55 = vld [vmem:[%s0 + $0x80] sm:$0xf]
  %v56 = vld [vmem:[%s0 + $0x84] sm:$0xf]
  %v57 = vld [vmem:[%s0 + $0x88] sm:$0xf]
  %v58 = vld [vmem:[%s0 + $0x8c] sm:$0xf]
  %v59 = vld [vmem:[%s0 + $0x90] sm:$0xf]
  %v60 = vld [vmem:[%s0 + $0x94] sm:$0xf]
  %v61 = vld [vmem:[%s0 + $0x98] sm:$0xf]
  %v62 = vld [vmem:[%s0 + $0x9c] sm:$0xf]
  %v63 = vld [vmem:[%s0 + $0xa0] sm:$0xf]
  %v64 = vld [vmem:[%s0 + $0xa4] sm:$0xf]
  %v65 = vld [vmem:[%s0 + $0xa8] sm:$0xf]
  %v66 = vld [vmem:[%s0 + $0xac] sm:$0xf]
  %v67 = vld [vmem:[%s0 + $0xb0] sm:$0xf]
  %v68 = vld [vmem:[%s0 + $0xb4] sm:$0xf]
  %v69 = vld [vmem:[%s0 + $0xb8] sm:$0xf]
  %v70 = vld [vmem:[%s0 + $0xbc] sm:$0xf]
  %v71 = vld [vmem:[%s0 + $0xc0] sm:$0xf]
  %v72 = vld [vmem:[%s0 + $0xc4] sm:$0xf]
  %v73 = vld [vmem:[%s0 + $0xc8] sm:$0xf]
  %v74 = vld [vmem:[%s0 + $0xcc] sm:$0xf]
  %v75 = vld [vmem:[%s0 + $0xd0] sm:$0xf]
  %v76 = vld [vmem:[%s0 + $0xd4] sm:$0xf]
  %v77 = vld [vmem:[%s0 + $0xd8] sm:$0xf]
  %v78 = vld [vmem:[%s0 + $0xdc] sm:$0xf]
  %v79 = vld [vmem:[%s0 + $0xe0] sm:$0xf]
  %v80 = vld [vmem:[%s0 + $0xe4] sm:$0xf]
  %v81 = vld [vmem:[%s0 + $0xe8] sm:$0xf]
  %v82 = vld [vmem:[%s0 + $0xec] sm:$0xf]
  %v83 = vld [vmem:[%s0 + $0xf0] sm:$0xf]
  %v84 = vld [vmem:[%s0 + $0xf4] sm:$0xf]
  %v85 = vld [vmem:[%s0 + $0xf8] sm:$0xf]
  %v86 = vld [vmem:[%s0 + $0xfc] sm:$0xf]
  %v88 = vperm.slane %v22, 0
  %v154 = vunpack.c.l.b16 %v23
  %v155 = vunpack.c.l.b16 %v24
  %v156 = vunpack.c.l.b16 %v25
  %v157 = vunpack.c.l.b16 %v26
  %v158 = vunpack.c.l.b16 %v27
  %v159 = vunpack.c.l.b16 %v28
  %v160 = vunpack.c.l.b16 %v29
  %v161 = vunpack.c.l.b16 %v30
  %v162 = vunpack.c.l.b16 %v31
  %v163 = vunpack.c.l.b16 %v32
  %v164 = vunpack.c.l.b16 %v33
  %v165 = vunpack.c.l.b16 %v34
  %v166 = vunpack.c.l.b16 %v35
  %v167 = vunpack.c.l.b16 %v36
  %v168 = vunpack.c.l.b16 %v37
  %v169 = vunpack.c.l.b16 %v38
  %v170 = vunpack.c.l.b16 %v39
  %v171 = vunpack.c.l.b16 %v40
  %v172 = vunpack.c.l.b16 %v41
  %v173 = vunpack.c.l.b16 %v42
  %v174 = vunpack.c.l.b16 %v43
  %v175 = vunpack.c.l.b16 %v44
  %v176 = vunpack.c.l.b16 %v45
  %v177 = vunpack.c.l.b16 %v46
  %v178 = vunpack.c.l.b16 %v47
  %v179 = vunpack.c.l.b16 %v48
  %v180 = vunpack.c.l.b16 %v49
  %v181 = vunpack.c.l.b16 %v50
  %v182 = vunpack.c.l.b16 %v51
  %v183 = vunpack.c.l.b16 %v52
  %v184 = vunpack.c.l.b16 %v53
  %v185 = vunpack.c.l.b16 %v54
  %v186 = vunpack.c.l.b16 %v55
  %v187 = vunpack.c.l.b16 %v56
  %v188 = vunpack.c.l.b16 %v57
  %v189 = vunpack.c.l.b16 %v58
  %v190 = vunpack.c.l.b16 %v59
  %v191 = vunpack.c.l.b16 %v60
  %v192 = vunpack.c.l.b16 %v61
  %v193 = vunpack.c.l.b16 %v62
  %v194 = vunpack.c.l.b16 %v63
  %v195 = vunpack.c.l.b16 %v64
  %v196 = vunpack.c.l.b16 %v65
  %v197 = vunpack.c.l.b16 %v66
  %v198 = vunpack.c.l.b16 %v67
  %v199 = vunpack.c.l.b16 %v68
  %v200 = vunpack.c.l.b16 %v69
  %v201 = vunpack.c.l.b16 %v70
  %v202 = vunpack.c.l.b16 %v71
  %v203 = vunpack.c.l.b16 %v72
  %v204 = vunpack.c.l.b16 %v73
  %v205 = vunpack.c.l.b16 %v74
  %v206 = vunpack.c.l.b16 %v75
  %v207 = vunpack.c.l.b16 %v76
  %v208 = vunpack.c.l.b16 %v77
  %v209 = vunpack.c.l.b16 %v78
  %v210 = vunpack.c.l.b16 %v79
  %v211 = vunpack.c.l.b16 %v80
  %v212 = vunpack.c.l.b16 %v81
  %v213 = vunpack.c.l.b16 %v82
  %v214 = vunpack.c.l.b16 %v83
  %v215 = vunpack.c.l.b16 %v84
  %v216 = vunpack.c.l.b16 %v85
  %v217 = vunpack.c.l.b16 %v86
  %v218 = vpack.c.b16 %v155, %v154
  %v219 = vpack.c.b16 %v157, %v156
  %v220 = vpack.c.b16 %v159, %v158
  %v221 = vpack.c.b16 %v161, %v160
  %v222 = vpack.c.b16 %v163, %v162
  %v223 = vpack.c.b16 %v165, %v164
  %v224 = vpack.c.b16 %v167, %v166
  %v225 = vpack.c.b16 %v169, %v168
  %v226 = vpack.c.b16 %v171, %v170
  %v227 = vpack.c.b16 %v173, %v172
  %v228 = vpack.c.b16 %v175, %v174
  %v229 = vpack.c.b16 %v177, %v176
  %v230 = vpack.c.b16 %v179, %v178
  %v231 = vpack.c.b16 %v181, %v180
  %v232 = vpack.c.b16 %v183, %v182
  %v233 = vpack.c.b16 %v185, %v184
  %v234 = vpack.c.b16 %v187, %v186
  %v235 = vpack.c.b16 %v189, %v188
  %v236 = vpack.c.b16 %v191, %v190
  %v237 = vpack.c.b16 %v193, %v192
  %v238 = vpack.c.b16 %v195, %v194
  %v239 = vpack.c.b16 %v197, %v196
  %v240 = vpack.c.b16 %v199, %v198
  %v241 = vpack.c.b16 %v201, %v200
  %v242 = vpack.c.b16 %v203, %v202
  %v243 = vpack.c.b16 %v205, %v204
  %v244 = vpack.c.b16 %v207, %v206
  %v245 = vpack.c.b16 %v209, %v208
  %v246 = vpack.c.b16 %v211, %v210
  %v247 = vpack.c.b16 %v213, %v212
  %v248 = vpack.c.b16 %v215, %v214
  %v249 = vpack.c.b16 %v217, %v216
  %v254 = vunpack.c.l.b16 %v18
  %v255 = vunpack.c.l.b16 %v19
  %v256 = vunpack.c.l.b16 %v20
  %v257 = vunpack.c.l.b16 %v21
  %v258 = vpack.c.b16 %v255, %v254
  %v259 = vpack.c.b16 %v257, %v256
  %vm261 = vcmask 220160
  %v263 = vsel %vm261, %v218, 0
  %v266 = vsel %vm261, %v219, 0
  %v269 = vsel %vm261, %v220, 0
  %v272 = vsel %vm261, %v221, 0
  %v275 = vsel %vm261, %v222, 0
  %v278 = vsel %vm261, %v223, 0
  %v281 = vsel %vm261, %v224, 0
  %v284 = vsel %vm261, %v225, 0
  %v287 = vsel %vm261, %v226, 0
  %v290 = vsel %vm261, %v227, 0
  %v293 = vsel %vm261, %v228, 0
  %v296 = vsel %vm261, %v229, 0
  %v299 = vsel %vm261, %v230, 0
  %v302 = vsel %vm261, %v231, 0
  %v305 = vsel %vm261, %v232, 0
  %v308 = vsel %vm261, %v233, 0
  %v311 = vsel %vm261, %v234, 0
  %v314 = vsel %vm261, %v235, 0
  %v317 = vsel %vm261, %v236, 0
  %v320 = vsel %vm261, %v237, 0
  %v323 = vsel %vm261, %v238, 0
  %v326 = vsel %vm261, %v239, 0
  %v329 = vsel %vm261, %v240, 0
  %v332 = vsel %vm261, %v241, 0
  %v335 = vsel %vm261, %v242, 0
  %v338 = vsel %vm261, %v243, 0
  %v341 = vsel %vm261, %v244, 0
  %v344 = vsel %vm261, %v245, 0
  %v347 = vsel %vm261, %v246, 0
  %v350 = vsel %vm261, %v247, 0
  %v353 = vsel %vm261, %v248, 0
  %v356 = vsel %vm261, %v249, 0
  %vm358 = vcmask 1044480
  %vm359 = vcmask 1045504
  %v360 = vsel %vm358, 4294967295, 65535
  %v361 = vsel %vm359, %v360, 0
  %v363 = vand.u32 %v259, %v361
  %365 = vmatpush.bf16.msra.mxu0 0
  %366 = vmatpush.bf16.msra.mxu0 0
  %367 = vmatpush.bf16.msra.mxu0 0
  %368 = vmatpush.bf16.msra.mxu0 0
  %369 = vmatpush.bf16.msra.mxu0 0
  %370 = vmatpush.bf16.msra.mxu0 0
  %371 = vmatpush.bf16.msra.mxu0 %v363
  %372 = vmatpush.bf16.msra.mxu0 %v258
  %373 = vmatmul.bf16.gmra.mxu0 %v263
  %v374 = vpop.f32.mrf.mxu0
  %v375 = vadd.f32 %v88, %v374
  %v376 = vpop.f32.mrf.mxu0
  %v377 = vadd.f32 %v88, %v376
  %378 = vmatmul.bf16.gmra.mxu0 %v266
  %v379 = vpop.f32.mrf.mxu0
  %v380 = vadd.f32 %v88, %v379
  %v381 = vpop.f32.mrf.mxu0
  %v382 = vadd.f32 %v88, %v381
  %383 = vmatmul.bf16.gmra.mxu0 %v269
  %v384 = vpop.f32.mrf.mxu0
  %v385 = vadd.f32 %v88, %v384
  %v386 = vpop.f32.mrf.mxu0
  %v387 = vadd.f32 %v88, %v386
  %388 = vmatmul.bf16.gmra.mxu0 %v272
  %v389 = vpop.f32.mrf.mxu0
  %v390 = vadd.f32 %v88, %v389
  %v391 = vpop.f32.mrf.mxu0
  %v392 = vadd.f32 %v88, %v391
  %393 = vmatmul.bf16.gmra.mxu0 %v275
  %v394 = vpop.f32.mrf.mxu0
  %v395 = vadd.f32 %v88, %v394
  %v396 = vpop.f32.mrf.mxu0
  %v397 = vadd.f32 %v88, %v396
  %398 = vmatmul.bf16.gmra.mxu0 %v278
  %v399 = vpop.f32.mrf.mxu0
  %v400 = vadd.f32 %v88, %v399
  %v401 = vpop.f32.mrf.mxu0
  %v402 = vadd.f32 %v88, %v401
  %403 = vmatmul.bf16.gmra.mxu0 %v281
  %v404 = vpop.f32.mrf.mxu0
  %v405 = vadd.f32 %v88, %v404
  %v406 = vpop.f32.mrf.mxu0
  %v407 = vadd.f32 %v88, %v406
  %408 = vmatmul.bf16.gmra.mxu0 %v284
  %v409 = vpop.f32.mrf.mxu0
  %v410 = vadd.f32 %v88, %v409
  %v411 = vpop.f32.mrf.mxu0
  %v412 = vadd.f32 %v88, %v411
  %413 = vmatmul.bf16.gmra.mxu0 %v287
  %v414 = vpop.f32.mrf.mxu0
  %v415 = vadd.f32 %v88, %v414
  %v416 = vpop.f32.mrf.mxu0
  %v417 = vadd.f32 %v88, %v416
  %418 = vmatmul.bf16.gmra.mxu0 %v290
  %v419 = vpop.f32.mrf.mxu0
  %v420 = vadd.f32 %v88, %v419
  %v421 = vpop.f32.mrf.mxu0
  %v422 = vadd.f32 %v88, %v421
  %423 = vmatmul.bf16.gmra.mxu0 %v293
  %v424 = vpop.f32.mrf.mxu0
  %v425 = vadd.f32 %v88, %v424
  %v426 = vpop.f32.mrf.mxu0
  %v427 = vadd.f32 %v88, %v426
  %428 = vmatmul.bf16.gmra.mxu0 %v296
  %v429 = vpop.f32.mrf.mxu0
  %v430 = vadd.f32 %v88, %v429
  %v431 = vpop.f32.mrf.mxu0
  %v432 = vadd.f32 %v88, %v431
  %433 = vmatmul.bf16.gmra.mxu0 %v299
  %v434 = vpop.f32.mrf.mxu0
  %v435 = vadd.f32 %v88, %v434
  %v436 = vpop.f32.mrf.mxu0
  %v437 = vadd.f32 %v88, %v436
  %438 = vmatmul.bf16.gmra.mxu0 %v302
  %v439 = vpop.f32.mrf.mxu0
  %v440 = vadd.f32 %v88, %v439
  %v441 = vpop.f32.mrf.mxu0
  %v442 = vadd.f32 %v88, %v441
  %443 = vmatmul.bf16.gmra.mxu0 %v305
  %v444 = vpop.f32.mrf.mxu0
  %v445 = vadd.f32 %v88, %v444
  %v446 = vpop.f32.mrf.mxu0
  %v447 = vadd.f32 %v88, %v446
  %448 = vmatmul.bf16.gmra.mxu0 %v308
  %v449 = vpop.f32.mrf.mxu0
  %v450 = vadd.f32 %v88, %v449
  %v451 = vpop.f32.mrf.mxu0
  %v452 = vadd.f32 %v88, %v451
  %453 = vmatmul.bf16.gmra.mxu0 %v311
  %v454 = vpop.f32.mrf.mxu0
  %v455 = vadd.f32 %v88, %v454
  %v456 = vpop.f32.mrf.mxu0
  %v457 = vadd.f32 %v88, %v456
  %458 = vmatmul.bf16.gmra.mxu0 %v314
  %v459 = vpop.f32.mrf.mxu0
  %v460 = vadd.f32 %v88, %v459
  %v461 = vpop.f32.mrf.mxu0
  %v462 = vadd.f32 %v88, %v461
  %463 = vmatmul.bf16.gmra.mxu0 %v317
  %v464 = vpop.f32.mrf.mxu0
  %v465 = vadd.f32 %v88, %v464
  %v466 = vpop.f32.mrf.mxu0
  %v467 = vadd.f32 %v88, %v466
  %468 = vmatmul.bf16.gmra.mxu0 %v320
  %v469 = vpop.f32.mrf.mxu0
  %v470 = vadd.f32 %v88, %v469
  %v471 = vpop.f32.mrf.mxu0
  %v472 = vadd.f32 %v88, %v471
  %473 = vmatmul.bf16.gmra.mxu0 %v323
  %v474 = vpop.f32.mrf.mxu0
  %v475 = vadd.f32 %v88, %v474
  %v476 = vpop.f32.mrf.mxu0
  %v477 = vadd.f32 %v88, %v476
  %478 = vmatmul.bf16.gmra.mxu0 %v326
  %v479 = vpop.f32.mrf.mxu0
  %v480 = vadd.f32 %v88, %v479
  %v481 = vpop.f32.mrf.mxu0
  %v482 = vadd.f32 %v88, %v481
  %483 = vmatmul.bf16.gmra.mxu0 %v329
  %v484 = vpop.f32.mrf.mxu0
  %v485 = vadd.f32 %v88, %v484
  %v486 = vpop.f32.mrf.mxu0
  %v487 = vadd.f32 %v88, %v486
  %488 = vmatmul.bf16.gmra.mxu0 %v332
  %v489 = vpop.f32.mrf.mxu0
  %v490 = vadd.f32 %v88, %v489
  %v491 = vpop.f32.mrf.mxu0
  %v492 = vadd.f32 %v88, %v491
  %493 = vmatmul.bf16.gmra.mxu0 %v335
  %v494 = vpop.f32.mrf.mxu0
  %v495 = vadd.f32 %v88, %v494
  %v496 = vpop.f32.mrf.mxu0
  %v497 = vadd.f32 %v88, %v496
  %498 = vmatmul.bf16.gmra.mxu0 %v338
  %v499 = vpop.f32.mrf.mxu0
  %v500 = vadd.f32 %v88, %v499
  %v501 = vpop.f32.mrf.mxu0
  %v502 = vadd.f32 %v88, %v501
  %503 = vmatmul.bf16.gmra.mxu0 %v341
  %v504 = vpop.f32.mrf.mxu0
  %v505 = vadd.f32 %v88, %v504
  %v506 = vpop.f32.mrf.mxu0
  %v507 = vadd.f32 %v88, %v506
  %508 = vmatmul.bf16.gmra.mxu0 %v344
  %v509 = vpop.f32.mrf.mxu0
  %v510 = vadd.f32 %v88, %v509
  %v511 = vpop.f32.mrf.mxu0
  %v512 = vadd.f32 %v88, %v511
  %513 = vmatmul.bf16.gmra.mxu0 %v347
  %v514 = vpop.f32.mrf.mxu0
  %v515 = vadd.f32 %v88, %v514
  %v516 = vpop.f32.mrf.mxu0
  %v517 = vadd.f32 %v88, %v516
  %518 = vmatmul.bf16.gmra.mxu0 %v350
  %v519 = vpop.f32.mrf.mxu0
  %v520 = vadd.f32 %v88, %v519
  %v521 = vpop.f32.mrf.mxu0
  %v522 = vadd.f32 %v88, %v521
  %523 = vmatmul.bf16.gmra.mxu0 %v353
  %v524 = vpop.f32.mrf.mxu0
  %v525 = vadd.f32 %v88, %v524
  %v526 = vpop.f32.mrf.mxu0
  %v527 = vadd.f32 %v88, %v526
  %528 = vmatmul.bf16.gmra.mxu0 %v356
  %v529 = vpop.f32.mrf.mxu0
  %v530 = vadd.f32 %v88, %v529
  %v531 = vpop.f32.mrf.mxu0
  %v532 = vadd.f32 %v88, %v531
  %533 = vdwg.mxu0
  %v534 = vmax.f32 %v375, 0.0
  %v535 = vmax.f32 %v377, 0.0
  %v536 = vmax.f32 %v380, 0.0
  %v537 = vmax.f32 %v382, 0.0
  %v538 = vmax.f32 %v385, 0.0
  %v539 = vmax.f32 %v387, 0.0
  %v540 = vmax.f32 %v390, 0.0
  %v541 = vmax.f32 %v392, 0.0
  %v542 = vmax.f32 %v395, 0.0
  %v543 = vmax.f32 %v397, 0.0
  %v544 = vmax.f32 %v400, 0.0
  %v545 = vmax.f32 %v402, 0.0
  %v546 = vmax.f32 %v405, 0.0
  %v547 = vmax.f32 %v407, 0.0
  %v548 = vmax.f32 %v410, 0.0
  %v549 = vmax.f32 %v412, 0.0
  %v550 = vmax.f32 %v415, 0.0
  %v551 = vmax.f32 %v417, 0.0
  %v552 = vmax.f32 %v420, 0.0
  %v553 = vmax.f32 %v422, 0.0
  %v554 = vmax.f32 %v425, 0.0
  %v555 = vmax.f32 %v427, 0.0
  %v556 = vmax.f32 %v430, 0.0
  %v557 = vmax.f32 %v432, 0.0
  %v558 = vmax.f32 %v435, 0.0
  %v559 = vmax.f32 %v437, 0.0
  %v560 = vmax.f32 %v440, 0.0
  %v561 = vmax.f32 %v442, 0.0
  %v562 = vmax.f32 %v445, 0.0
  %v563 = vmax.f32 %v447, 0.0
  %v564 = vmax.f32 %v450, 0.0
  %v565 = vmax.f32 %v452, 0.0
  %v566 = vmax.f32 %v455, 0.0
  %v567 = vmax.f32 %v457, 0.0
  %v568 = vmax.f32 %v460, 0.0
  %v569 = vmax.f32 %v462, 0.0
  %v570 = vmax.f32 %v465, 0.0
  %v571 = vmax.f32 %v467, 0.0
  %v572 = vmax.f32 %v470, 0.0
  %v573 = vmax.f32 %v472, 0.0
  %v574 = vmax.f32 %v475, 0.0
  %v575 = vmax.f32 %v477, 0.0
  %v576 = vmax.f32 %v480, 0.0
  %v577 = vmax.f32 %v482, 0.0
  %v578 = vmax.f32 %v485, 0.0
  %v579 = vmax.f32 %v487, 0.0
  %v580 = vmax.f32 %v490, 0.0
  %v581 = vmax.f32 %v492, 0.0
  %v582 = vmax.f32 %v495, 0.0
  %v583 = vmax.f32 %v497, 0.0
  %v584 = vmax.f32 %v500, 0.0
  %v585 = vmax.f32 %v502, 0.0
  %v586 = vmax.f32 %v505, 0.0
  %v587 = vmax.f32 %v507, 0.0
  %v588 = vmax.f32 %v510, 0.0
  %v589 = vmax.f32 %v512, 0.0
  %v590 = vmax.f32 %v515, 0.0
  %v591 = vmax.f32 %v517, 0.0
  %v592 = vmax.f32 %v520, 0.0
  %v593 = vmax.f32 %v522, 0.0
  %v594 = vmax.f32 %v525, 0.0
  %v595 = vmax.f32 %v527, 0.0
  %v596 = vmax.f32 %v530, 0.0
  %v597 = vmax.f32 %v532, 0.0
  %v598 = vld [vmem:[%s1] sm:$0xf]
  %v599 = vld [vmem:[%s1 + $0x4] sm:$0xf]
  %v600 = vld [vmem:[%s1 + $0x8] sm:$0xf]
  %v601 = vld [vmem:[%s1 + $0xc] sm:$0xf]
  %v602 = vld [vmem:[%s1 + $0x10] sm:$0xf]
  %v603 = vld [vmem:[%s1 + $0x14] sm:$0xf]
  %v604 = vld [vmem:[%s1 + $0x18] sm:$0xf]
  %v605 = vld [vmem:[%s1 + $0x1c] sm:$0xf]
  %v606 = vld [vmem:[%s1 + $0x20] sm:$0xf]
  %v607 = vld [vmem:[%s1 + $0x24] sm:$0xf]
  %v608 = vld [vmem:[%s1 + $0x28] sm:$0xf]
  %v609 = vld [vmem:[%s1 + $0x2c] sm:$0xf]
  %v610 = vld [vmem:[%s1 + $0x30] sm:$0xf]
  %v611 = vld [vmem:[%s1 + $0x34] sm:$0xf]
  %v612 = vld [vmem:[%s1 + $0x38] sm:$0xf]
  %v613 = vld [vmem:[%s1 + $0x3c] sm:$0xf]
  %v614 = vld [vmem:[%s1 + $0x40] sm:$0xf]
  %v615 = vld [vmem:[%s1 + $0x44] sm:$0xf]
  %v616 = vld [vmem:[%s1 + $0x48] sm:$0xf]
  %v617 = vld [vmem:[%s1 + $0x4c] sm:$0xf]
  %v618 = vld [vmem:[%s1 + $0x50] sm:$0xf]
  %v619 = vld [vmem:[%s1 + $0x54] sm:$0xf]
  %v620 = vld [vmem:[%s1 + $0x58] sm:$0xf]
  %v621 = vld [vmem:[%s1 + $0x5c] sm:$0xf]
  %v622 = vld [vmem:[%s1 + $0x60] sm:$0xf]
  %v623 = vld [vmem:[%s1 + $0x64] sm:$0xf]
  %v624 = vld [vmem:[%s1 + $0x68] sm:$0xf]
  %v625 = vld [vmem:[%s1 + $0x6c] sm:$0xf]
  %v626 = vld [vmem:[%s1 + $0x70] sm:$0xf]
  %v627 = vld [vmem:[%s1 + $0x74] sm:$0xf]
  %v628 = vld [vmem:[%s1 + $0x78] sm:$0xf]
  %v629 = vld [vmem:[%s1 + $0x7c] sm:$0xf]
  %v630 = vld [vmem:[%s1 + $0x80] sm:$0xf]
  %v631 = vld [vmem:[%s1 + $0x84] sm:$0xf]
  %v632 = vld [vmem:[%s1 + $0x88] sm:$0xf]
  %v633 = vld [vmem:[%s1 + $0x8c] sm:$0xf]
  %v634 = vld [vmem:[%s1 + $0x90] sm:$0xf]
  %v635 = vld [vmem:[%s1 + $0x94] sm:$0xf]
  %v636 = vld [vmem:[%s1 + $0x98] sm:$0xf]
  %v637 = vld [vmem:[%s1 + $0x9c] sm:$0xf]
  %v638 = vld [vmem:[%s1 + $0xa0] sm:$0xf]
  %v639 = vld [vmem:[%s1 + $0xa4] sm:$0xf]
  %v640 = vld [vmem:[%s1 + $0xa8] sm:$0xf]
  %v641 = vld [vmem:[%s1 + $0xac] sm:$0xf]
  %v642 = vld [vmem:[%s1 + $0xb0] sm:$0xf]
  %v643 = vld [vmem:[%s1 + $0xb4] sm:$0xf]
  %v644 = vld [vmem:[%s1 + $0xb8] sm:$0xf]
  %v645 = vld [vmem:[%s1 + $0xbc] sm:$0xf]
  %v646 = vld [vmem:[%s1 + $0xc0] sm:$0xf]
  %v647 = vld [vmem:[%s1 + $0xc4] sm:$0xf]
  %v648 = vld [vmem:[%s1 + $0xc8] sm:$0xf]
  %v649 = vld [vmem:[%s1 + $0xcc] sm:$0xf]
  %v650 = vld [vmem:[%s1 + $0xd0] sm:$0xf]
  %v651 = vld [vmem:[%s1 + $0xd4] sm:$0xf]
  %v652 = vld [vmem:[%s1 + $0xd8] sm:$0xf]
  %v653 = vld [vmem:[%s1 + $0xdc] sm:$0xf]
  %v654 = vld [vmem:[%s1 + $0xe0] sm:$0xf]
  %v655 = vld [vmem:[%s1 + $0xe4] sm:$0xf]
  %v656 = vld [vmem:[%s1 + $0xe8] sm:$0xf]
  %v657 = vld [vmem:[%s1 + $0xec] sm:$0xf]
  %v658 = vld [vmem:[%s1 + $0xf0] sm:$0xf]
  %v659 = vld [vmem:[%s1 + $0xf4] sm:$0xf]
  %v660 = vld [vmem:[%s1 + $0xf8] sm:$0xf]
  %v661 = vld [vmem:[%s1 + $0xfc] sm:$0xf]
  %v726 = vunpack.c.l.b16 %v598
  %v727 = vunpack.c.l.b16 %v599
  %v728 = vunpack.c.l.b16 %v600
  %v729 = vunpack.c.l.b16 %v601
  %v730 = vunpack.c.l.b16 %v602
  %v731 = vunpack.c.l.b16 %v603
  %v732 = vunpack.c.l.b16 %v604
  %v733 = vunpack.c.l.b16 %v605
  %v734 = vunpack.c.l.b16 %v606
  %v735 = vunpack.c.l.b16 %v607
  %v736 = vunpack.c.l.b16 %v608
  %v737 = vunpack.c.l.b16 %v609
  %v738 = vunpack.c.l.b16 %v610
  %v739 = vunpack.c.l.b16 %v611
  %v740 = vunpack.c.l.b16 %v612
  %v741 = vunpack.c.l.b16 %v613
  %v742 = vunpack.c.l.b16 %v614
  %v743 = vunpack.c.l.b16 %v615
  %v744 = vunpack.c.l.b16 %v616
  %v745 = vunpack.c.l.b16 %v617
  %v746 = vunpack.c.l.b16 %v618
  %v747 = vunpack.c.l.b16 %v619
  %v748 = vunpack.c.l.b16 %v620
  %v749 = vunpack.c.l.b16 %v621
  %v750 = vunpack.c.l.b16 %v622
  %v751 = vunpack.c.l.b16 %v623
  %v752 = vunpack.c.l.b16 %v624
  %v753 = vunpack.c.l.b16 %v625
  %v754 = vunpack.c.l.b16 %v626
  %v755 = vunpack.c.l.b16 %v627
  %v756 = vunpack.c.l.b16 %v628
  %v757 = vunpack.c.l.b16 %v629
  %v758 = vunpack.c.l.b16 %v630
  %v759 = vunpack.c.l.b16 %v631
  %v760 = vunpack.c.l.b16 %v632
  %v761 = vunpack.c.l.b16 %v633
  %v762 = vunpack.c.l.b16 %v634
  %v763 = vunpack.c.l.b16 %v635
  %v764 = vunpack.c.l.b16 %v636
  %v765 = vunpack.c.l.b16 %v637
  %v766 = vunpack.c.l.b16 %v638
  %v767 = vunpack.c.l.b16 %v639
  %v768 = vunpack.c.l.b16 %v640
  %v769 = vunpack.c.l.b16 %v641
  %v770 = vunpack.c.l.b16 %v642
  %v771 = vunpack.c.l.b16 %v643
  %v772 = vunpack.c.l.b16 %v644
  %v773 = vunpack.c.l.b16 %v645
  %v774 = vunpack.c.l.b16 %v646
  %v775 = vunpack.c.l.b16 %v647
  %v776 = vunpack.c.l.b16 %v648
  %v777 = vunpack.c.l.b16 %v649
  %v778 = vunpack.c.l.b16 %v650
  %v779 = vunpack.c.l.b16 %v651
  %v780 = vunpack.c.l.b16 %v652
  %v781 = vunpack.c.l.b16 %v653
  %v782 = vunpack.c.l.b16 %v654
  %v783 = vunpack.c.l.b16 %v655
  %v784 = vunpack.c.l.b16 %v656
  %v785 = vunpack.c.l.b16 %v657
  %v786 = vunpack.c.l.b16 %v658
  %v787 = vunpack.c.l.b16 %v659
  %v788 = vunpack.c.l.b16 %v660
  %v789 = vunpack.c.l.b16 %v661
  %v790 = vpack.c.b16 %v727, %v726
  %v791 = vpack.c.b16 %v729, %v728
  %v792 = vpack.c.b16 %v731, %v730
  %v793 = vpack.c.b16 %v733, %v732
  %v794 = vpack.c.b16 %v735, %v734
  %v795 = vpack.c.b16 %v737, %v736
  %v796 = vpack.c.b16 %v739, %v738
  %v797 = vpack.c.b16 %v741, %v740
  %v798 = vpack.c.b16 %v743, %v742
  %v799 = vpack.c.b16 %v745, %v744
  %v800 = vpack.c.b16 %v747, %v746
  %v801 = vpack.c.b16 %v749, %v748
  %v802 = vpack.c.b16 %v751, %v750
  %v803 = vpack.c.b16 %v753, %v752
  %v804 = vpack.c.b16 %v755, %v754
  %v805 = vpack.c.b16 %v757, %v756
  %v806 = vpack.c.b16 %v759, %v758
  %v807 = vpack.c.b16 %v761, %v760
  %v808 = vpack.c.b16 %v763, %v762
  %v809 = vpack.c.b16 %v765, %v764
  %v810 = vpack.c.b16 %v767, %v766
  %v811 = vpack.c.b16 %v769, %v768
  %v812 = vpack.c.b16 %v771, %v770
  %v813 = vpack.c.b16 %v773, %v772
  %v814 = vpack.c.b16 %v775, %v774
  %v815 = vpack.c.b16 %v777, %v776
  %v816 = vpack.c.b16 %v779, %v778
  %v817 = vpack.c.b16 %v781, %v780
  %v818 = vpack.c.b16 %v783, %v782
  %v819 = vpack.c.b16 %v785, %v784
  %v820 = vpack.c.b16 %v787, %v786
  %v821 = vpack.c.b16 %v789, %v788
  %v823 = vsel %vm261, %v790, 0
  %v826 = vsel %vm261, %v791, 0
  %v829 = vsel %vm261, %v792, 0
  %v832 = vsel %vm261, %v793, 0
  %v835 = vsel %vm261, %v794, 0
  %v838 = vsel %vm261, %v795, 0
  %v841 = vsel %vm261, %v796, 0
  %v844 = vsel %vm261, %v797, 0
  %v847 = vsel %vm261, %v798, 0
  %v850 = vsel %vm261, %v799, 0
  %v853 = vsel %vm261, %v800, 0
  %v856 = vsel %vm261, %v801, 0
  %v859 = vsel %vm261, %v802, 0
  %v862 = vsel %vm261, %v803, 0
  %v865 = vsel %vm261, %v804, 0
  %v868 = vsel %vm261, %v805, 0
  %v871 = vsel %vm261, %v806, 0
  %v874 = vsel %vm261, %v807, 0
  %v877 = vsel %vm261, %v808, 0
  %v880 = vsel %vm261, %v809, 0
  %v883 = vsel %vm261, %v810, 0
  %v886 = vsel %vm261, %v811, 0
  %v889 = vsel %vm261, %v812, 0
  %v892 = vsel %vm261, %v813, 0
  %v895 = vsel %vm261, %v814, 0
  %v898 = vsel %vm261, %v815, 0
  %v901 = vsel %vm261, %v816, 0
  %v904 = vsel %vm261, %v817, 0
  %v907 = vsel %vm261, %v818, 0
  %v910 = vsel %vm261, %v819, 0
  %v913 = vsel %vm261, %v820, 0
  %v916 = vsel %vm261, %v821, 0
  %918 = vmatpush.bf16.msra.mxu0 0
  %919 = vmatpush.bf16.msra.mxu0 0
  %920 = vmatpush.bf16.msra.mxu0 0
  %921 = vmatpush.bf16.msra.mxu0 0
  %922 = vmatpush.bf16.msra.mxu0 0
  %923 = vmatpush.bf16.msra.mxu0 0
  %924 = vmatpush.bf16.msra.mxu0 %v363
  %925 = vmatpush.bf16.msra.mxu0 %v258
  %926 = vmatmul.bf16.gmra.mxu0 %v823
  %v927 = vpop.f32.mrf.mxu0
  %v928 = vadd.f32 %v88, %v927
  %v929 = vpop.f32.mrf.mxu0
  %v930 = vadd.f32 %v88, %v929
  %931 = vmatmul.bf16.gmra.mxu0 %v826
  %v932 = vpop.f32.mrf.mxu0
  %v933 = vadd.f32 %v88, %v932
  %v934 = vpop.f32.mrf.mxu0
  %v935 = vadd.f32 %v88, %v934
  %936 = vmatmul.bf16.gmra.mxu0 %v829
  %v937 = vpop.f32.mrf.mxu0
  %v938 = vadd.f32 %v88, %v937
  %v939 = vpop.f32.mrf.mxu0
  %v940 = vadd.f32 %v88, %v939
  %941 = vmatmul.bf16.gmra.mxu0 %v832
  %v942 = vpop.f32.mrf.mxu0
  %v943 = vadd.f32 %v88, %v942
  %v944 = vpop.f32.mrf.mxu0
  %v945 = vadd.f32 %v88, %v944
  %946 = vmatmul.bf16.gmra.mxu0 %v835
  %v947 = vpop.f32.mrf.mxu0
  %v948 = vadd.f32 %v88, %v947
  %v949 = vpop.f32.mrf.mxu0
  %v950 = vadd.f32 %v88, %v949
  %951 = vmatmul.bf16.gmra.mxu0 %v838
  %v952 = vpop.f32.mrf.mxu0
  %v953 = vadd.f32 %v88, %v952
  %v954 = vpop.f32.mrf.mxu0
  %v955 = vadd.f32 %v88, %v954
  %956 = vmatmul.bf16.gmra.mxu0 %v841
  %v957 = vpop.f32.mrf.mxu0
  %v958 = vadd.f32 %v88, %v957
  %v959 = vpop.f32.mrf.mxu0
  %v960 = vadd.f32 %v88, %v959
  %961 = vmatmul.bf16.gmra.mxu0 %v844
  %v962 = vpop.f32.mrf.mxu0
  %v963 = vadd.f32 %v88, %v962
  %v964 = vpop.f32.mrf.mxu0
  %v965 = vadd.f32 %v88, %v964
  %966 = vmatmul.bf16.gmra.mxu0 %v847
  %v967 = vpop.f32.mrf.mxu0
  %v968 = vadd.f32 %v88, %v967
  %v969 = vpop.f32.mrf.mxu0
  %v970 = vadd.f32 %v88, %v969
  %971 = vmatmul.bf16.gmra.mxu0 %v850
  %v972 = vpop.f32.mrf.mxu0
  %v973 = vadd.f32 %v88, %v972
  %v974 = vpop.f32.mrf.mxu0
  %v975 = vadd.f32 %v88, %v974
  %976 = vmatmul.bf16.gmra.mxu0 %v853
  %v977 = vpop.f32.mrf.mxu0
  %v978 = vadd.f32 %v88, %v977
  %v979 = vpop.f32.mrf.mxu0
  %v980 = vadd.f32 %v88, %v979
  %981 = vmatmul.bf16.gmra.mxu0 %v856
  %v982 = vpop.f32.mrf.mxu0
  %v983 = vadd.f32 %v88, %v982
  %v984 = vpop.f32.mrf.mxu0
  %v985 = vadd.f32 %v88, %v984
  %986 = vmatmul.bf16.gmra.mxu0 %v859
  %v987 = vpop.f32.mrf.mxu0
  %v988 = vadd.f32 %v88, %v987
  %v989 = vpop.f32.mrf.mxu0
  %v990 = vadd.f32 %v88, %v989
  %991 = vmatmul.bf16.gmra.mxu0 %v862
  %v992 = vpop.f32.mrf.mxu0
  %v993 = vadd.f32 %v88, %v992
  %v994 = vpop.f32.mrf.mxu0
  %v995 = vadd.f32 %v88, %v994
  %996 = vmatmul.bf16.gmra.mxu0 %v865
  %v997 = vpop.f32.mrf.mxu0
  %v998 = vadd.f32 %v88, %v997
  %v999 = vpop.f32.mrf.mxu0
  %v1000 = vadd.f32 %v88, %v999
  %1001 = vmatmul.bf16.gmra.mxu0 %v868
  %v1002 = vpop.f32.mrf.mxu0
  %v1003 = vadd.f32 %v88, %v1002
  %v1004 = vpop.f32.mrf.mxu0
  %v1005 = vadd.f32 %v88, %v1004
  %1006 = vmatmul.bf16.gmra.mxu0 %v871
  %v1007 = vpop.f32.mrf.mxu0
  %v1008 = vadd.f32 %v88, %v1007
  %v1009 = vpop.f32.mrf.mxu0
  %v1010 = vadd.f32 %v88, %v1009
  %1011 = vmatmul.bf16.gmra.mxu0 %v874
  %v1012 = vpop.f32.mrf.mxu0
  %v1013 = vadd.f32 %v88, %v1012
  %v1014 = vpop.f32.mrf.mxu0
  %v1015 = vadd.f32 %v88, %v1014
  %1016 = vmatmul.bf16.gmra.mxu0 %v877
  %v1017 = vpop.f32.mrf.mxu0
  %v1018 = vadd.f32 %v88, %v1017
  %v1019 = vpop.f32.mrf.mxu0
  %v1020 = vadd.f32 %v88, %v1019
  %1021 = vmatmul.bf16.gmra.mxu0 %v880
  %v1022 = vpop.f32.mrf.mxu0
  %v1023 = vadd.f32 %v88, %v1022
  %v1024 = vpop.f32.mrf.mxu0
  %v1025 = vadd.f32 %v88, %v1024
  %1026 = vmatmul.bf16.gmra.mxu0 %v883
  %v1027 = vpop.f32.mrf.mxu0
  %v1028 = vadd.f32 %v88, %v1027
  %v1029 = vpop.f32.mrf.mxu0
  %v1030 = vadd.f32 %v88, %v1029
  %1031 = vmatmul.bf16.gmra.mxu0 %v886
  %v1032 = vpop.f32.mrf.mxu0
  %v1033 = vadd.f32 %v88, %v1032
  %v1034 = vpop.f32.mrf.mxu0
  %v1035 = vadd.f32 %v88, %v1034
  %1036 = vmatmul.bf16.gmra.mxu0 %v889
  %v1037 = vpop.f32.mrf.mxu0
  %v1038 = vadd.f32 %v88, %v1037
  %v1039 = vpop.f32.mrf.mxu0
  %v1040 = vadd.f32 %v88, %v1039
  %1041 = vmatmul.bf16.gmra.mxu0 %v892
  %v1042 = vpop.f32.mrf.mxu0
  %v1043 = vadd.f32 %v88, %v1042
  %v1044 = vpop.f32.mrf.mxu0
  %v1045 = vadd.f32 %v88, %v1044
  %1046 = vmatmul.bf16.gmra.mxu0 %v895
  %v1047 = vpop.f32.mrf.mxu0
  %v1048 = vadd.f32 %v88, %v1047
  %v1049 = vpop.f32.mrf.mxu0
  %v1050 = vadd.f32 %v88, %v1049
  %1051 = vmatmul.bf16.gmra.mxu0 %v898
  %v1052 = vpop.f32.mrf.mxu0
  %v1053 = vadd.f32 %v88, %v1052
  %v1054 = vpop.f32.mrf.mxu0
  %v1055 = vadd.f32 %v88, %v1054
  %1056 = vmatmul.bf16.gmra.mxu0 %v901
  %v1057 = vpop.f32.mrf.mxu0
  %v1058 = vadd.f32 %v88, %v1057
  %v1059 = vpop.f32.mrf.mxu0
  %v1060 = vadd.f32 %v88, %v1059
  %1061 = vmatmul.bf16.gmra.mxu0 %v904
  %v1062 = vpop.f32.mrf.mxu0
  %v1063 = vadd.f32 %v88, %v1062
  %v1064 = vpop.f32.mrf.mxu0
  %v1065 = vadd.f32 %v88, %v1064
  %1066 = vmatmul.bf16.gmra.mxu0 %v907
  %v1067 = vpop.f32.mrf.mxu0
  %v1068 = vadd.f32 %v88, %v1067
  %v1069 = vpop.f32.mrf.mxu0
  %v1070 = vadd.f32 %v88, %v1069
  %1071 = vmatmul.bf16.gmra.mxu0 %v910
  %v1072 = vpop.f32.mrf.mxu0
  %v1073 = vadd.f32 %v88, %v1072
  %v1074 = vpop.f32.mrf.mxu0
  %v1075 = vadd.f32 %v88, %v1074
  %1076 = vmatmul.bf16.gmra.mxu0 %v913
  %v1077 = vpop.f32.mrf.mxu0
  %v1078 = vadd.f32 %v88, %v1077
  %v1079 = vpop.f32.mrf.mxu0
  %v1080 = vadd.f32 %v88, %v1079
  %1081 = vmatmul.bf16.gmra.mxu0 %v916
  %v1082 = vpop.f32.mrf.mxu0
  %v1083 = vadd.f32 %v88, %v1082
  %v1084 = vpop.f32.mrf.mxu0
  %v1085 = vadd.f32 %v88, %v1084
  %1086 = vdwg.mxu0
  %v1087 = vmax.f32 %v928, 0.0
  %v1088 = vmax.f32 %v930, 0.0
  %v1089 = vmax.f32 %v933, 0.0
  %v1090 = vmax.f32 %v935, 0.0
  %v1091 = vmax.f32 %v938, 0.0
  %v1092 = vmax.f32 %v940, 0.0
  %v1093 = vmax.f32 %v943, 0.0
  %v1094 = vmax.f32 %v945, 0.0
  %v1095 = vmax.f32 %v948, 0.0
  %v1096 = vmax.f32 %v950, 0.0
  %v1097 = vmax.f32 %v953, 0.0
  %v1098 = vmax.f32 %v955, 0.0
  %v1099 = vmax.f32 %v958, 0.0
  %v1100 = vmax.f32 %v960, 0.0
  %v1101 = vmax.f32 %v963, 0.0
  %v1102 = vmax.f32 %v965, 0.0
  %v1103 = vmax.f32 %v968, 0.0
  %v1104 = vmax.f32 %v970, 0.0
  %v1105 = vmax.f32 %v973, 0.0
  %v1106 = vmax.f32 %v975, 0.0
  %v1107 = vmax.f32 %v978, 0.0
  %v1108 = vmax.f32 %v980, 0.0
  %v1109 = vmax.f32 %v983, 0.0
  %v1110 = vmax.f32 %v985, 0.0
  %v1111 = vmax.f32 %v988, 0.0
  %v1112 = vmax.f32 %v990, 0.0
  %v1113 = vmax.f32 %v993, 0.0
  %v1114 = vmax.f32 %v995, 0.0
  %v1115 = vmax.f32 %v998, 0.0
  %v1116 = vmax.f32 %v1000, 0.0
  %v1117 = vmax.f32 %v1003, 0.0
  %v1118 = vmax.f32 %v1005, 0.0
  %v1119 = vmax.f32 %v1008, 0.0
  %v1120 = vmax.f32 %v1010, 0.0
  %v1121 = vmax.f32 %v1013, 0.0
  %v1122 = vmax.f32 %v1015, 0.0
  %v1123 = vmax.f32 %v1018, 0.0
  %v1124 = vmax.f32 %v1020, 0.0
  %v1125 = vmax.f32 %v1023, 0.0
  %v1126 = vmax.f32 %v1025, 0.0
  %v1127 = vmax.f32 %v1028, 0.0
  %v1128 = vmax.f32 %v1030, 0.0
  %v1129 = vmax.f32 %v1033, 0.0
  %v1130 = vmax.f32 %v1035, 0.0
  %v1131 = vmax.f32 %v1038, 0.0
  %v1132 = vmax.f32 %v1040, 0.0
  %v1133 = vmax.f32 %v1043, 0.0
  %v1134 = vmax.f32 %v1045, 0.0
  %v1135 = vmax.f32 %v1048, 0.0
  %v1136 = vmax.f32 %v1050, 0.0
  %v1137 = vmax.f32 %v1053, 0.0
  %v1138 = vmax.f32 %v1055, 0.0
  %v1139 = vmax.f32 %v1058, 0.0
  %v1140 = vmax.f32 %v1060, 0.0
  %v1141 = vmax.f32 %v1063, 0.0
  %v1142 = vmax.f32 %v1065, 0.0
  %v1143 = vmax.f32 %v1068, 0.0
  %v1144 = vmax.f32 %v1070, 0.0
  %v1145 = vmax.f32 %v1073, 0.0
  %v1146 = vmax.f32 %v1075, 0.0
  %v1147 = vmax.f32 %v1078, 0.0
  %v1148 = vmax.f32 %v1080, 0.0
  %v1149 = vmax.f32 %v1083, 0.0
  %v1150 = vmax.f32 %v1085, 0.0
  %v1151 = vsub.f32 %v534, %v1087
  %v1152 = vsub.f32 %v535, %v1088
  %v1153 = vsub.f32 %v536, %v1089
  %v1154 = vsub.f32 %v537, %v1090
  %v1155 = vsub.f32 %v538, %v1091
  %v1156 = vsub.f32 %v539, %v1092
  %v1157 = vsub.f32 %v540, %v1093
  %v1158 = vsub.f32 %v541, %v1094
  %v1159 = vsub.f32 %v542, %v1095
  %v1160 = vsub.f32 %v543, %v1096
  %v1161 = vsub.f32 %v544, %v1097
  %v1162 = vsub.f32 %v545, %v1098
  %v1163 = vsub.f32 %v546, %v1099
  %v1164 = vsub.f32 %v547, %v1100
  %v1165 = vsub.f32 %v548, %v1101
  %v1166 = vsub.f32 %v549, %v1102
  %v1167 = vsub.f32 %v550, %v1103
  %v1168 = vsub.f32 %v551, %v1104
  %v1169 = vsub.f32 %v552, %v1105
  %v1170 = vsub.f32 %v553, %v1106
  %v1171 = vsub.f32 %v554, %v1107
  %v1172 = vsub.f32 %v555, %v1108
  %v1173 = vsub.f32 %v556, %v1109
  %v1174 = vsub.f32 %v557, %v1110
  %v1175 = vsub.f32 %v558, %v1111
  %v1176 = vsub.f32 %v559, %v1112
  %v1177 = vsub.f32 %v560, %v1113
  %v1178 = vsub.f32 %v561, %v1114
  %v1179 = vsub.f32 %v562, %v1115
  %v1180 = vsub.f32 %v563, %v1116
  %v1181 = vsub.f32 %v564, %v1117
  %v1182 = vsub.f32 %v565, %v1118
  %v1183 = vsub.f32 %v566, %v1119
  %v1184 = vsub.f32 %v567, %v1120
  %v1185 = vsub.f32 %v568, %v1121
  %v1186 = vsub.f32 %v569, %v1122
  %v1187 = vsub.f32 %v570, %v1123
  %v1188 = vsub.f32 %v571, %v1124
  %v1189 = vsub.f32 %v572, %v1125
  %v1190 = vsub.f32 %v573, %v1126
  %v1191 = vsub.f32 %v574, %v1127
  %v1192 = vsub.f32 %v575, %v1128
  %v1193 = vsub.f32 %v576, %v1129
  %v1194 = vsub.f32 %v577, %v1130
  %v1195 = vsub.f32 %v578, %v1131
  %v1196 = vsub.f32 %v579, %v1132
  %v1197 = vsub.f32 %v580, %v1133
  %v1198 = vsub.f32 %v581, %v1134
  %v1199 = vsub.f32 %v582, %v1135
  %v1200 = vsub.f32 %v583, %v1136
  %v1201 = vsub.f32 %v584, %v1137
  %v1202 = vsub.f32 %v585, %v1138
  %v1203 = vsub.f32 %v586, %v1139
  %v1204 = vsub.f32 %v587, %v1140
  %v1205 = vsub.f32 %v588, %v1141
  %v1206 = vsub.f32 %v589, %v1142
  %v1207 = vsub.f32 %v590, %v1143
  %v1208 = vsub.f32 %v591, %v1144
  %v1209 = vsub.f32 %v592, %v1145
  %v1210 = vsub.f32 %v593, %v1146
  %v1211 = vsub.f32 %v594, %v1147
  %v1212 = vsub.f32 %v595, %v1148
  %v1213 = vsub.f32 %v596, %v1149
  %v1214 = vsub.f32 %v597, %v1150
  %v1215 = vand.u32 2147483647, %v1151
  %v1216 = vand.u32 2147483647, %v1152
  %v1217 = vand.u32 2147483647, %v1153
  %v1218 = vand.u32 2147483647, %v1154
  %v1219 = vand.u32 2147483647, %v1155
  %v1220 = vand.u32 2147483647, %v1156
  %v1221 = vand.u32 2147483647, %v1157
  %v1222 = vand.u32 2147483647, %v1158
  %v1223 = vand.u32 2147483647, %v1159
  %v1224 = vand.u32 2147483647, %v1160
  %v1225 = vand.u32 2147483647, %v1161
  %v1226 = vand.u32 2147483647, %v1162
  %v1227 = vand.u32 2147483647, %v1163
  %v1228 = vand.u32 2147483647, %v1164
  %v1229 = vand.u32 2147483647, %v1165
  %v1230 = vand.u32 2147483647, %v1166
  %v1231 = vand.u32 2147483647, %v1167
  %v1232 = vand.u32 2147483647, %v1168
  %v1233 = vand.u32 2147483647, %v1169
  %v1234 = vand.u32 2147483647, %v1170
  %v1235 = vand.u32 2147483647, %v1171
  %v1236 = vand.u32 2147483647, %v1172
  %v1237 = vand.u32 2147483647, %v1173
  %v1238 = vand.u32 2147483647, %v1174
  %v1239 = vand.u32 2147483647, %v1175
  %v1240 = vand.u32 2147483647, %v1176
  %v1241 = vand.u32 2147483647, %v1177
  %v1242 = vand.u32 2147483647, %v1178
  %v1243 = vand.u32 2147483647, %v1179
  %v1244 = vand.u32 2147483647, %v1180
  %v1245 = vand.u32 2147483647, %v1181
  %v1246 = vand.u32 2147483647, %v1182
  %v1247 = vand.u32 2147483647, %v1183
  %v1248 = vand.u32 2147483647, %v1184
  %v1249 = vand.u32 2147483647, %v1185
  %v1250 = vand.u32 2147483647, %v1186
  %v1251 = vand.u32 2147483647, %v1187
  %v1252 = vand.u32 2147483647, %v1188
  %v1253 = vand.u32 2147483647, %v1189
  %v1254 = vand.u32 2147483647, %v1190
  %v1255 = vand.u32 2147483647, %v1191
  %v1256 = vand.u32 2147483647, %v1192
  %v1257 = vand.u32 2147483647, %v1193
  %v1258 = vand.u32 2147483647, %v1194
  %v1259 = vand.u32 2147483647, %v1195
  %v1260 = vand.u32 2147483647, %v1196
  %v1261 = vand.u32 2147483647, %v1197
  %v1262 = vand.u32 2147483647, %v1198
  %v1263 = vand.u32 2147483647, %v1199
  %v1264 = vand.u32 2147483647, %v1200
  %v1265 = vand.u32 2147483647, %v1201
  %v1266 = vand.u32 2147483647, %v1202
  %v1267 = vand.u32 2147483647, %v1203
  %v1268 = vand.u32 2147483647, %v1204
  %v1269 = vand.u32 2147483647, %v1205
  %v1270 = vand.u32 2147483647, %v1206
  %v1271 = vand.u32 2147483647, %v1207
  %v1272 = vand.u32 2147483647, %v1208
  %v1273 = vand.u32 2147483647, %v1209
  %v1274 = vand.u32 2147483647, %v1210
  %v1275 = vand.u32 2147483647, %v1211
  %v1276 = vand.u32 2147483647, %v1212
  %v1277 = vand.u32 2147483647, %v1213
  %v1278 = vand.u32 2147483647, %v1214
  %vm1279 = vcmask 523264
  %v1280 = vsel %vm1279, %v1215, 0.0
  %v1281 = vsel %vm1279, %v1216, 0.0
  %v1282 = vadd.f32 %v1280, %v1281
  %v1283 = vsel %vm1279, %v1217, 0.0
  %v1284 = vadd.f32 %v1282, %v1283
  %v1285 = vsel %vm1279, %v1218, 0.0
  %v1286 = vadd.f32 %v1284, %v1285
  %v1287 = vsel %vm1279, %v1219, 0.0
  %v1288 = vadd.f32 %v1286, %v1287
  %v1289 = vsel %vm1279, %v1220, 0.0
  %v1290 = vadd.f32 %v1288, %v1289
  %v1291 = vsel %vm1279, %v1221, 0.0
  %v1292 = vadd.f32 %v1290, %v1291
  %v1293 = vsel %vm1279, %v1222, 0.0
  %v1294 = vadd.f32 %v1292, %v1293
  %v1295 = vsel %vm1279, %v1223, 0.0
  %v1296 = vadd.f32 %v1294, %v1295
  %v1297 = vsel %vm1279, %v1224, 0.0
  %v1298 = vadd.f32 %v1296, %v1297
  %v1299 = vsel %vm1279, %v1225, 0.0
  %v1300 = vadd.f32 %v1298, %v1299
  %v1301 = vsel %vm1279, %v1226, 0.0
  %v1302 = vadd.f32 %v1300, %v1301
  %v1303 = vsel %vm1279, %v1227, 0.0
  %v1304 = vadd.f32 %v1302, %v1303
  %v1305 = vsel %vm1279, %v1228, 0.0
  %v1306 = vadd.f32 %v1304, %v1305
  %v1307 = vsel %vm1279, %v1229, 0.0
  %v1308 = vadd.f32 %v1306, %v1307
  %v1309 = vsel %vm1279, %v1230, 0.0
  %v1310 = vadd.f32 %v1308, %v1309
  %v1311 = vsel %vm1279, %v1231, 0.0
  %v1312 = vadd.f32 %v1310, %v1311
  %v1313 = vsel %vm1279, %v1232, 0.0
  %v1314 = vadd.f32 %v1312, %v1313
  %v1315 = vsel %vm1279, %v1233, 0.0
  %v1316 = vadd.f32 %v1314, %v1315
  %v1317 = vsel %vm1279, %v1234, 0.0
  %v1318 = vadd.f32 %v1316, %v1317
  %v1319 = vsel %vm1279, %v1235, 0.0
  %v1320 = vadd.f32 %v1318, %v1319
  %v1321 = vsel %vm1279, %v1236, 0.0
  %v1322 = vadd.f32 %v1320, %v1321
  %v1323 = vsel %vm1279, %v1237, 0.0
  %v1324 = vadd.f32 %v1322, %v1323
  %v1325 = vsel %vm1279, %v1238, 0.0
  %v1326 = vadd.f32 %v1324, %v1325
  %v1327 = vsel %vm1279, %v1239, 0.0
  %v1328 = vadd.f32 %v1326, %v1327
  %v1329 = vsel %vm1279, %v1240, 0.0
  %v1330 = vadd.f32 %v1328, %v1329
  %v1331 = vsel %vm1279, %v1241, 0.0
  %v1332 = vadd.f32 %v1330, %v1331
  %v1333 = vsel %vm1279, %v1242, 0.0
  %v1334 = vadd.f32 %v1332, %v1333
  %v1335 = vsel %vm1279, %v1243, 0.0
  %v1336 = vadd.f32 %v1334, %v1335
  %v1337 = vsel %vm1279, %v1244, 0.0
  %v1338 = vadd.f32 %v1336, %v1337
  %v1339 = vsel %vm1279, %v1245, 0.0
  %v1340 = vadd.f32 %v1338, %v1339
  %v1341 = vsel %vm1279, %v1246, 0.0
  %v1342 = vadd.f32 %v1340, %v1341
  %v1343 = vsel %vm1279, %v1247, 0.0
  %v1344 = vadd.f32 %v1342, %v1343
  %v1345 = vsel %vm1279, %v1248, 0.0
  %v1346 = vadd.f32 %v1344, %v1345
  %v1347 = vsel %vm1279, %v1249, 0.0
  %v1348 = vadd.f32 %v1346, %v1347
  %v1349 = vsel %vm1279, %v1250, 0.0
  %v1350 = vadd.f32 %v1348, %v1349
  %v1351 = vsel %vm1279, %v1251, 0.0
  %v1352 = vadd.f32 %v1350, %v1351
  %v1353 = vsel %vm1279, %v1252, 0.0
  %v1354 = vadd.f32 %v1352, %v1353
  %v1355 = vsel %vm1279, %v1253, 0.0
  %v1356 = vadd.f32 %v1354, %v1355
  %v1357 = vsel %vm1279, %v1254, 0.0
  %v1358 = vadd.f32 %v1356, %v1357
  %v1359 = vsel %vm1279, %v1255, 0.0
  %v1360 = vadd.f32 %v1358, %v1359
  %v1361 = vsel %vm1279, %v1256, 0.0
  %v1362 = vadd.f32 %v1360, %v1361
  %v1363 = vsel %vm1279, %v1257, 0.0
  %v1364 = vadd.f32 %v1362, %v1363
  %v1365 = vsel %vm1279, %v1258, 0.0
  %v1366 = vadd.f32 %v1364, %v1365
  %v1367 = vsel %vm1279, %v1259, 0.0
  %v1368 = vadd.f32 %v1366, %v1367
  %v1369 = vsel %vm1279, %v1260, 0.0
  %v1370 = vadd.f32 %v1368, %v1369
  %v1371 = vsel %vm1279, %v1261, 0.0
  %v1372 = vadd.f32 %v1370, %v1371
  %v1373 = vsel %vm1279, %v1262, 0.0
  %v1374 = vadd.f32 %v1372, %v1373
  %v1375 = vsel %vm1279, %v1263, 0.0
  %v1376 = vadd.f32 %v1374, %v1375
  %v1377 = vsel %vm1279, %v1264, 0.0
  %v1378 = vadd.f32 %v1376, %v1377
  %v1379 = vsel %vm1279, %v1265, 0.0
  %v1380 = vadd.f32 %v1378, %v1379
  %v1381 = vsel %vm1279, %v1266, 0.0
  %v1382 = vadd.f32 %v1380, %v1381
  %v1383 = vsel %vm1279, %v1267, 0.0
  %v1384 = vadd.f32 %v1382, %v1383
  %v1385 = vsel %vm1279, %v1268, 0.0
  %v1386 = vadd.f32 %v1384, %v1385
  %v1387 = vsel %vm1279, %v1269, 0.0
  %v1388 = vadd.f32 %v1386, %v1387
  %v1389 = vsel %vm1279, %v1270, 0.0
  %v1390 = vadd.f32 %v1388, %v1389
  %v1391 = vsel %vm1279, %v1271, 0.0
  %v1392 = vadd.f32 %v1390, %v1391
  %v1393 = vsel %vm1279, %v1272, 0.0
  %v1394 = vadd.f32 %v1392, %v1393
  %v1395 = vsel %vm1279, %v1273, 0.0
  %v1396 = vadd.f32 %v1394, %v1395
  %v1397 = vsel %vm1279, %v1274, 0.0
  %v1398 = vadd.f32 %v1396, %v1397
  %v1399 = vsel %vm1279, %v1275, 0.0
  %v1400 = vadd.f32 %v1398, %v1399
  %v1401 = vsel %vm1279, %v1276, 0.0
  %v1402 = vadd.f32 %v1400, %v1401
  %v1403 = vsel %vm1279, %v1277, 0.0
  %v1404 = vadd.f32 %v1402, %v1403
  %v1405 = vsel %vm1279, %v1278, 0.0
  %v1406 = vadd.f32 %v1404, %v1405
  %v1407 = vrot.slane %v1406, 4
  %v1408 = vadd.f32 %v1406, %v1407
  %v1409 = vrot.slane %v1408, 2
  %v1410 = vadd.f32 %v1408, %v1409
  %v1411 = vrot.slane %v1410, 1
  %v1412 = vadd.f32 %v1410, %v1411
  %vm1413 = vcmask 516096
  %1414 = vst.msk [vmem:[%s4] sm:$0x1] %vm1413, %v1412
  // Predicated region
  $region18: #{vgg_loss.1} parent=0 // pred_check
    _
  $region19: #{vgg_loss.1} parent=0 // pred_check_branch
    %1416 = sbr.rel (0) target = $region21
  $region20: #{vgg_loss.1} parent=0 // pred_region
    _
  $region21: #{vgg_loss.1} parent=0 // pred_fallthru
    _
  // Predicated region
  $region22: #{vgg_loss.1} parent=0 // pred_check
    _
  $region23: #{vgg_loss.1} parent=0 // pred_check_branch
    %1418 = sbr.rel (0) target = $region25
  $region24: #{vgg_loss.1} parent=0 // pred_region
    _
  $region25: #{vgg_loss.1} parent=0 // pred_fallthru
    _

</llo_original>
